<compile_context>
chip_gen: v7x
topology: tpu7x:2x2x1
jax: 0.10.0
libtpu: 0.0.40
codegen_flags: <defaults>
</compile_context>

<pallas_src>
import functools

import numpy as np
import jax
import jax.numpy as jnp
from jax import lax
from jax.experimental import pallas as pl
from jax.experimental.pallas import tpu as pltpu


# ----------------------------- kernels ------------------------------------ #

def _cfl_kernel_flat(mask_ref, orig_ref, outimg_ref, p_ref, o_ref):
    # mask_ref   : (Cm_blk, Hi*Wi)  native dtype (Cm_blk == 1 -> shared mask)
    # orig_ref   : (Cblk,   Hi*Wi)  native dtype
    # outimg_ref : (Cblk,   Ho*Wo)  native dtype
    # p_ref      : (Hi*Wi,  Ho*Wo)  one-hot Kronecker nearest-selection matrix
    # o_ref      : (Cblk,   Ho*Wo)  native dtype (lane-dense stores)
    p = p_ref[...]
    dn = (((1,), (0,)), ((), ()))
    mask_re = lax.dot_general(mask_ref[...], p, dn,
                              preferred_element_type=jnp.float32)
    origin_re = lax.dot_general(orig_ref[...], p, dn,
                                preferred_element_type=jnp.float32)
    y = outimg_ref[...].astype(jnp.float32)
    # 3-op blend, f32 accumulation in vregs; mask broadcasts over channels when
    # Cm_blk == 1 (computed once per grid step).
    o_ref[...] = (origin_re + mask_re * (y - origin_re)).astype(o_ref.dtype)


def _cfl_kernel_sep(mask_ref, orig_ref, outimg_ref, ph_ref, pwt_ref, o_ref,
                    *, w_first):
    # mask_ref   : (Cm_blk, Hi, Wi)  native dtype
    # orig_ref   : (Cblk,   Hi, Wi)  native dtype
    # outimg_ref : (Cblk,   Ho, Wo)  native dtype
    # ph_ref     : (Ho, Hi) one-hot row selection
    # pwt_ref    : (Wi, Wo) one-hot column selection (pre-transposed)
    # o_ref      : (Cblk,   Ho, Wo)  native dtype
    ph = ph_ref[...]
    pwt = pwt_ref[...]
    dn = (((1,), (0,)), ((), ()))

    def up2d(x2d):
        # Nearest-neighbor upsample of one (Hi, Wi) plane -> (Ho, Wo) f32.
        # ph / pwt stay stationary across channels (no broadcast materialization).
        if w_first:
            z = lax.dot_general(x2d, pwt, dn, preferred_element_type=jnp.float32)
            z = z.astype(x2d.dtype)  # exact: one-hot selection only moves values
            return lax.dot_general(ph, z, dn, preferred_element_type=jnp.float32)
        else:
            z = lax.dot_general(ph, x2d, dn, preferred_element_type=jnp.float32)
            z = z.astype(x2d.dtype)
            return lax.dot_general(z, pwt, dn, preferred_element_type=jnp.float32)

    cm = mask_ref.shape[0]
    cb = orig_ref.shape[0]
    mask_shared = up2d(mask_ref[0]) if cm == 1 else None
    for c in range(cb):
        m = mask_shared if cm == 1 else up2d(mask_ref[c])
        origin_re = up2d(orig_ref[c])
        y = outimg_ref[c].astype(jnp.float32)
        o_ref[c, :, :] = (origin_re + m * (y - origin_re)).astype(o_ref.dtype)


# --------------------------- helpers (host) -------------------------------- #

def _nearest_src_indices(out_size: int, in_size: int, scale: float) -> np.ndarray:
    # PyTorch nearest (scale_factor given): src = min(floor(dst / scale), in - 1)
    dst = np.arange(out_size)
    return np.minimum(np.floor(dst / scale).astype(np.int64), in_size - 1)


def _selection_matrix(out_size, in_size, scale, dtype, transpose=False):
    src = _nearest_src_indices(out_size, in_size, scale)
    p = np.zeros((out_size, in_size), dtype=np.float32)
    p[np.arange(out_size), src] = 1.0
    if transpose:
        p = p.T
    return jnp.asarray(p, dtype=dtype)


def _kron_selection_matrix(Ho, Hi, Wo, Wi, scale, dtype):
    src_h = _nearest_src_indices(Ho, Hi, scale)
    src_w = _nearest_src_indices(Wo, Wi, scale)
    rows = (src_h[:, None] * Wi + src_w[None, :]).reshape(-1)  # source flat index
    cols = np.arange(Ho * Wo)
    p = np.zeros((Hi * Wi, Ho * Wo), dtype=np.float32)
    p[rows, cols] = 1.0
    return jnp.asarray(p, dtype=dtype)


def _tpu_target_info():
    """(vmem_capacity_bytes, tensorcores_per_device) with conservative fallbacks."""
    vmem_cap = 128 * 1024 * 1024
    num_tc = 1
    try:
        info = pltpu.get_tpu_info()
        vmem_cap = int(getattr(info, "vmem_capacity_bytes", vmem_cap))
    except Exception:
        pass
    try:
        kind = jax.devices()[0].device_kind.lower()
    except Exception:
        kind = ""
    # v4 (megacore) and v7x expose 2 TensorCores per device; v5e/v6e expose 1.
    if ("v4" in kind) or ("7" in kind):
        num_tc = 2
    if "7" in kind:  # v7x: 64 MiB per TensorCore even if the query says otherwise
        vmem_cap = min(vmem_cap, 64 * 1024 * 1024)
    return vmem_cap, num_tc


def _divisors_desc(n):
    return [d for d in range(n, 0, -1) if n % d == 0]


def _vmem_bytes_flat(cb, cm_blk, hiwi, howo, isz):
    dma = 2 * isz * (cm_blk * hiwi + cb * hiwi + 2 * cb * howo)   # double-buffered tiles
    consts = 2 * isz * hiwi * howo                                # selection matrix (x2 buf)
    live = 4 * (cm_blk * howo + 3 * cb * howo) + isz * (cm_blk + cb) * hiwi
    return dma + consts + live


def _vmem_bytes_sep(cb, cm_blk, Hi, Wi, Ho, Wo, isz):
    dma = 2 * isz * (cm_blk * Hi * Wi + cb * Hi * Wi + 2 * cb * Ho * Wo)
    consts = 2 * isz * (Ho * Hi + Wi * Wo)
    inter = max(Hi * Wo, Ho * Wi)
    live = 4 * (3 * Ho * Wo + inter) + isz * (Hi * Wi + inter + Ho * Wo)
    return dma + consts + live


def _pick(candidates, fits):
    for d in candidates:
        if fits(d):
            return d
    return None


_FLAT_P_MAX_BYTES = 2 * 1024 * 1024   # max size of the Kronecker selection matrix


# ------------------------------ wrapper ------------------------------------ #

@functools.partial(jax.jit, static_argnames=("block_channels",))
def cfl_forward(mask, original_img, out_img, block_channels=None):
    """mask: (B, Cm, Hi, Wi); original_img: (B, C, Hi, Wi); out_img: (B, C, Ho, Wo)."""
    B, Cm, Hmi, Wmi = mask.shape
    Bo, C, Hi, Wi = original_img.shape
    B2, Co, Ho, Wo = out_img.shape
    assert Bo == B and B2 == B and Co == C and Hmi == Hi and Wmi == Wi
    assert Cm in (1, C), f"mask channels must be 1 or {C}, got {Cm}"

    scale = float(Wo) / float(Wi)
    # interpolate output sizes must coincide with out_img spatial dims for the blend
    assert int(Hi * scale) == Ho and int(Wi * scale) == Wo

    # Keep the native dtype end-to-end (bf16 stays bf16 in HBM); only promote if
    # the three inputs disagree (mirrors torch type promotion).
    dtype = jnp.result_type(mask.dtype, original_img.dtype, out_img.dtype)
    if not jnp.issubdtype(dtype, jnp.floating):
        dtype = jnp.dtype(jnp.float32)
    itemsize = jnp.dtype(dtype).itemsize
    mask = mask.astype(dtype)                 # no-ops when dtypes already match
    original_img = original_img.astype(dtype)
    out_img = out_img.astype(dtype)

    # Generation-aware VMEM budget (v5e/v6e: 128 MiB, v7x: 64 MiB/TC) and TC count.
    vmem_cap, num_tc = _tpu_target_info()
    vmem_cap_limit = min(int(0.70 * vmem_cap), 100 * 1024 * 1024)
    budget = vmem_cap_limit // 2

    HiWi, HoWo = Hi * Wi, Ho * Wo
    flat_capable = HiWi * HoWo * itemsize <= _FLAT_P_MAX_BYTES

    def _flat_ok_cb(d):
        # Flat path folds channels into the sublane dim of the (cb, Hi*Wi) /
        # (cb, Ho*Wo) blocks -> obey the (8, 128)-or-full-dim rule.
        return d == C or d % 8 == 0

    def _cm_of(d):
        return 1 if Cm == 1 else d

    use_flat = False
    if block_channels is not None:
        cblk = int(block_channels)
        assert C % cblk == 0, f"block_channels must divide C ({C}), got {cblk}"
        use_flat = flat_capable and _flat_ok_cb(cblk)
    else:
        cblk = None
        if flat_capable:
            cands = [d for d in _divisors_desc(C) if _flat_ok_cb(d)]
            cblk = _pick(cands, lambda d: _vmem_bytes_flat(
                d, _cm_of(d), HiWi, HoWo, itemsize) <= budget)
            use_flat = cblk is not None
        if cblk is None:
            cblk = _pick(_divisors_desc(C), lambda d: _vmem_bytes_sep(
                d, _cm_of(d), Hi, Wi, Ho, Wo, itemsize) <= budget)
            if cblk is None:
                cblk = 1
        # v7x / megacore occupancy: guarantee at least num_tc grid steps so no
        # TensorCore idles (only matters when B * C//cblk would be 1).
        if num_tc > 1 and B * (C // cblk) < num_tc:
            smaller = [d for d in _divisors_desc(C)
                       if d <= C // num_tc and (not use_flat or _flat_ok_cb(d))]
            if use_flat:
                fits = lambda d: _vmem_bytes_flat(d, _cm_of(d), HiWi, HoWo, itemsize) <= budget
            else:
                fits = lambda d: _vmem_bytes_sep(d, _cm_of(d), Hi, Wi, Ho, Wo, itemsize) <= budget
            alt = _pick(smaller, fits)
            if alt is not None:
                cblk = alt

    cm_blk = _cm_of(cblk)
    if use_flat:
        est = _vmem_bytes_flat(cblk, cm_blk, HiWi, HoWo, itemsize)
    else:
        est = _vmem_bytes_sep(cblk, cm_blk, Hi, Wi, Ho, Wo, itemsize)
    vmem_limit = int(min(max(2 * est, 32 * 1024 * 1024), vmem_cap_limit))

    sq = pl.Squeezed()
    grid = (B, C // cblk)
    compiler_params = pltpu.CompilerParams(
        dimension_semantics=("parallel", "parallel"),
        vmem_limit_bytes=vmem_limit)

    if use_flat:
        # Lane-dense path: spatial dims flattened in the wrapper (metadata-only
        # reshape), single Kronecker one-hot matmul inside the kernel.
        p_flat = _kron_selection_matrix(Ho, Hi, Wo, Wi, scale, dtype)
        mask_in = mask.reshape(B, Cm, HiWi)
        orig_in = original_img.reshape(B, C, HiWi)
        out_in = out_img.reshape(B, C, HoWo)
        mask_map = (lambda b, c: (b, c, 0)) if Cm == C else (lambda b, c: (b, 0, 0))
        grid_spec = pltpu.PrefetchScalarGridSpec(
            num_scalar_prefetch=0,
            grid=grid,
            in_specs=[
                pl.BlockSpec((sq, cm_blk, HiWi), mask_map),
                pl.BlockSpec((sq, cblk, HiWi), lambda b, c: (b, c, 0)),
                pl.BlockSpec((sq, cblk, HoWo), lambda b, c: (b, c, 0)),
                # Constant index_map: fetched once; default double-buffering kept
                # (pl.Buffered(1) skipped for lowering safety, cost is in `est`).
                pl.BlockSpec((HiWi, HoWo), lambda b, c: (0, 0)),
            ],
            out_specs=pl.BlockSpec((sq, cblk, HoWo), lambda b, c: (b, c, 0)),
        )
        flat_out = pl.pallas_call(
            _cfl_kernel_flat,
            out_shape=jax.ShapeDtypeStruct((B, C, HoWo), dtype),
            grid_spec=grid_spec,
            compiler_params=compiler_params,
        )(mask_in, orig_in, out_in, p_flat)
        return flat_out.reshape(B, C, Ho, Wo)

    # Separable path for larger images: two one-hot matmuls per channel, with
    # the contraction order chosen at trace time (cheaper side first).
    ph = _selection_matrix(Ho, Hi, scale, dtype)                   # (Ho, Hi)
    pwt = _selection_matrix(Wo, Wi, scale, dtype, transpose=True)  # (Wi, Wo)
    cost_w_first = Hi * Wi * Wo + Ho * Hi * Wo
    cost_h_first = Ho * Hi * Wi + Ho * Wi * Wo
    w_first = cost_w_first <= cost_h_first

    mask_map = (lambda b, c: (b, c, 0, 0)) if Cm == C else (lambda b, c: (b, 0, 0, 0))
    grid_spec = pltpu.PrefetchScalarGridSpec(
        num_scalar_prefetch=0,
        grid=grid,
        in_specs=[
            pl.BlockSpec((sq, cm_blk, Hi, Wi), mask_map),
            pl.BlockSpec((sq, cblk, Hi, Wi), lambda b, c: (b, c, 0, 0)),
            pl.BlockSpec((sq, cblk, Ho, Wo), lambda b, c: (b, c, 0, 0)),
            pl.BlockSpec((Ho, Hi), lambda b, c: (0, 0)),
            pl.BlockSpec((Wi, Wo), lambda b, c: (0, 0)),
        ],
        out_specs=pl.BlockSpec((sq, cblk, Ho, Wo), lambda b, c: (b, c, 0, 0)),
    )
    return pl.pallas_call(
        functools.partial(_cfl_kernel_sep, w_first=w_first),
        out_shape=jax.ShapeDtypeStruct((B, C, Ho, Wo), dtype),
        grid_spec=grid_spec,
        compiler_params=compiler_params,
    )(mask, original_img, out_img, ph, pwt)


# ----------------------------- reference ----------------------------------- #

def _reference(mask, original_img, out_img):
    # Pure-JAX reference of the PyTorch forward (nearest interpolate + blend).
    Hi, Wi = original_img.shape[-2:]
    Ho, Wo = out_img.shape[-2:]
    scale = Wo / Wi
    src_h = jnp.minimum(jnp.floor(jnp.arange(Ho) / scale).astype(jnp.int32), Hi - 1)
    src_w = jnp.minimum(jnp.floor(jnp.arange(Wo) / scale).astype(jnp.int32), Wi - 1)
    mask_re = mask[:, :, src_h][:, :, :, src_w]
    origin_re = original_img[:, :, src_h][:, :, :, src_w]
    return mask_re * out_img + (1.0 - mask_re) * origin_re


if __name__ == "__main__":
    key = jax.random.PRNGKey(0)
    k1, k2, k3, k4 = jax.random.split(key, 4)

    B, C, Hi, Wi = 2, 4, 8, 8
    Ho, Wo = 16, 16  # scale_factor = 2.0

    mask = jax.random.uniform(k1, (B, 1, Hi, Wi), dtype=jnp.float32)  # soft mask in [0,1)
    original_img = jax.random.normal(k2, (B, C, Hi, Wi), dtype=jnp.float32)
    out_img = jax.random.normal(k3, (B, C, Ho, Wo), dtype=jnp.float32)

    # Case 1: broadcast mask, auto channel block -> flat (Kronecker, lane-dense) path.
    result = cfl_forward(mask, original_img, out_img)
    jax.block_until_ready(result)
    ref = _reference(mask, original_img, out_img)
    assert result.shape == (B, C, Ho, Wo)
    assert jnp.allclose(result, ref, atol=1e-5, rtol=1e-5)

    # Case 2: per-channel mask with block_channels=2 (not flat-compatible) ->
    # separable path with a multi-step channel grid.
    mask_full = jax.random.uniform(k4, (B, C, Hi, Wi), dtype=jnp.float32)
    result2 = cfl_forward(mask_full, original_img, out_img, block_channels=2)
    jax.block_until_ready(result2)
    ref2 = _reference(mask_full, original_img, out_img)
    assert jnp.allclose(result2, ref2, atol=1e-5, rtol=1e-5)

    # Case 3: bf16 end-to-end (native dtype preserved in HBM, f32 blend in vregs).
    mask_bf = mask.astype(jnp.bfloat16)
    orig_bf = original_img.astype(jnp.bfloat16)
    out_bf = out_img.astype(jnp.bfloat16)
    result3 = cfl_forward(mask_bf, orig_bf, out_bf)
    jax.block_until_ready(result3)
    assert result3.dtype == jnp.bfloat16
    ref3 = _reference(mask_bf.astype(jnp.float32), orig_bf.astype(jnp.float32),
                      out_bf.astype(jnp.float32))
    assert jnp.allclose(result3.astype(jnp.float32), ref3, atol=2e-2, rtol=2e-2)

    print("KERNEL_OK")
</pallas_src>

<mosaic_0001>
module attributes {stable_mosaic.version = 11 : i64} {
  func.func @_cfl_kernel_flat(%arg0: i32, %arg1: i32, %arg2: memref<1x1x64xf32, #tpu.memory_space<vmem>>, %arg3: memref<1x4x64xf32, #tpu.memory_space<vmem>>, %arg4: memref<1x4x256xf32, #tpu.memory_space<vmem>>, %arg5: memref<64x256xf32, #tpu.memory_space<vmem>>, %arg6: memref<1x4x256xf32, #tpu.memory_space<vmem>>) attributes {dimension_semantics = [#tpu.dimension_semantics<parallel>, #tpu.dimension_semantics<parallel>], iteration_bounds = array<i64: 2, 1>, scalar_prefetch = 0 : i64, scratch_operands = 0 : i64, tpu.core_type = #tpu.core_type<tc>, window_params = [{transform_indices = @transform_0, window_bounds = array<i64: 1, 1, 64>}, {transform_indices = @transform_1, window_bounds = array<i64: 1, 4, 64>}, {transform_indices = @transform_2, window_bounds = array<i64: 1, 4, 256>}, {pipeline_mode = #tpu.pipeline_mode<synchronous>, transform_indices = @transform_3, window_bounds = array<i64: 64, 256>}, {transform_indices = @transform_4, window_bounds = array<i64: 1, 4, 256>}]} {
    %c0 = arith.constant 0 : index
    %c0_0 = arith.constant 0 : index
    %0 = vector.load %arg5[%c0, %c0_0] : memref<64x256xf32, #tpu.memory_space<vmem>>, vector<64x256xf32>
    %c0_1 = arith.constant 0 : index
    %c0_2 = arith.constant 0 : index
    %c0_3 = arith.constant 0 : index
    %1 = vector.load %arg2[%c0_1, %c0_2, %c0_3] : memref<1x1x64xf32, #tpu.memory_space<vmem>>, vector<1x1x64xf32>
    %2 = vector.shape_cast %1 : vector<1x1x64xf32> to vector<1x64xf32>
    %cst = arith.constant dense<0.000000e+00> : vector<1x256xf32>
    %3 = tpu.matmul %2, %0, %cst {dimension_numbers = #tpu.dot_dimension_numbers<[1], [0], [0], [1], [0, 0, 1, 1], [], []>} : vector<1x64xf32>, vector<64x256xf32>, vector<1x256xf32> -> vector<1x256xf32>
    %c0_4 = arith.constant 0 : index
    %c0_5 = arith.constant 0 : index
    %c0_6 = arith.constant 0 : index
    %4 = vector.load %arg3[%c0_4, %c0_5, %c0_6] : memref<1x4x64xf32, #tpu.memory_space<vmem>>, vector<1x4x64xf32>
    %5 = vector.shape_cast %4 : vector<1x4x64xf32> to vector<4x64xf32>
    %cst_7 = arith.constant dense<0.000000e+00> : vector<4x256xf32>
    %6 = tpu.matmul %5, %0, %cst_7 {dimension_numbers = #tpu.dot_dimension_numbers<[1], [0], [0], [1], [0, 0, 1, 1], [], []>} : vector<4x64xf32>, vector<64x256xf32>, vector<4x256xf32> -> vector<4x256xf32>
    %c0_8 = arith.constant 0 : index
    %c0_9 = arith.constant 0 : index
    %c0_10 = arith.constant 0 : index
    %7 = vector.load %arg4[%c0_8, %c0_9, %c0_10] : memref<1x4x256xf32, #tpu.memory_space<vmem>>, vector<1x4x256xf32>
    %8 = vector.shape_cast %7 : vector<1x4x256xf32> to vector<4x256xf32>
    %9 = arith.subf %8, %6 : vector<4x256xf32>
    %10 = vector.broadcast %3 : vector<1x256xf32> to vector<4x256xf32>
    %11 = arith.mulf %10, %9 : vector<4x256xf32>
    %12 = arith.addf %6, %11 : vector<4x256xf32>
    %c0_11 = arith.constant 0 : index
    %c0_12 = arith.constant 0 : index
    %c0_13 = arith.constant 0 : index
    %13 = vector.load %arg6[%c0_11, %c0_12, %c0_13] : memref<1x4x256xf32, #tpu.memory_space<vmem>>, vector<1x4x256xf32>
    %14 = vector.shape_cast %13 : vector<1x4x256xf32> to vector<4x256xf32>
    %15 = vector.shape_cast %12 : vector<4x256xf32> to vector<1x4x256xf32>
    tpu.vector_store %arg6[%c0_11, %c0_12, %c0_13], %15 {strides = array<i32>} : memref<1x4x256xf32, #tpu.memory_space<vmem>>, vector<1x4x256xf32>,
    return
  }
  func.func @transform_0(%arg0: i32, %arg1: i32) -> (i32, i32, i32) {
    %c0_i32 = arith.constant 0 : i32
    %c0_i32_0 = arith.constant 0 : i32
    %c0_i32_1 = arith.constant 0 : i32
    return %arg0, %c0_i32, %c0_i32_0 : i32, i32, i32
  }
  func.func @transform_1(%arg0: i32, %arg1: i32) -> (i32, i32, i32) {
    %c0_i32 = arith.constant 0 : i32
    %c0_i32_0 = arith.constant 0 : i32
    return %arg0, %arg1, %c0_i32 : i32, i32, i32
  }
  func.func @transform_2(%arg0: i32, %arg1: i32) -> (i32, i32, i32) {
    %c0_i32 = arith.constant 0 : i32
    %c0_i32_0 = arith.constant 0 : i32
    return %arg0, %arg1, %c0_i32 : i32, i32, i32
  }
  func.func @transform_3(%arg0: i32, %arg1: i32) -> (i32, i32) {
    %c0_i32 = arith.constant 0 : i32
    %c0_i32_0 = arith.constant 0 : i32
    %c0_i32_1 = arith.constant 0 : i32
    return %c0_i32, %c0_i32_0 : i32, i32
  }
  func.func @transform_4(%arg0: i32, %arg1: i32) -> (i32, i32, i32) {
    %c0_i32 = arith.constant 0 : i32
    %c0_i32_0 = arith.constant 0 : i32
    return %arg0, %arg1, %c0_i32 : i32, i32, i32
  }
}

</mosaic_0001>

<llo_original>
// kernel: cfl_forward.1
$region0: #{cfl_forward.1}
  #allocation0 [shape = 'u32[]', space=smem, size = 0x4, offset = 0x4, fixed_abs, tag = 'smem constant byte address 0x4 - core index']
  #allocation1 [shape = 'u32[144,128]{1,0:T(1,128)}', space=vmem, size = 0x12000, scoped, tag = 'internal scratch']
  %s0 = inlined_call_operand.vmem [shape: f32[2,1,64], index: 0, kind: input, shape index: {}]
  %s1 = inlined_call_operand.vmem [shape: f32[2,4,64], index: 1, kind: input, shape index: {}]
  %s2 = inlined_call_operand.vmem [shape: f32[2,4,256], index: 2, kind: input, shape index: {}]
  %s3 = inlined_call_operand.vmem [shape: f32[64,256], index: 3, kind: input, shape index: {}]
  %s4 = inlined_call_operand.vmem [shape: f32[2,4,256], index: 4, kind: output, shape index: {}]
  %s5 = sld [smem:[#allocation0]]
  $region49: #{cfl_forward.1} parent=0
    _
  %s7 = ssub.s32 1, %s5
  %s8 = scalar_select 0, %s7, %s5
  loop: start=0, step=1, limit=4
  $region2: #{cfl_forward.1} parent=0 // loop_pre_header
    _
  $region3: #{cfl_forward.1} parent=0 // loop_header
    %s10 = sphi 0, %s14
    %p11 = scmp.ge.s32.totalorder %s10, 4
    %s17 = sphi 0, %s29
    %s18 = sphi 0, %s25
    %s19 = sphi 0, %s17
    %s20 = sphi 0, %s18
    %s21 = sphi 0, %s19
    %s22 = sphi 0, %s20
    %s32 = sphi 0, %s34
    %s35 = sphi 0, %s32
    %s36 = sphi 0, %s35
    %s52 = sphi 0, %s36
    %s60 = sphi 0, %s62
    %s63 = sphi 0, %s60
    %s64 = sphi 0, %s63
    %s80 = sphi 0, %s64
    %s88 = sphi 0, %s90
    %s91 = sphi 0, %s88
    %s92 = sphi 0, %s91
    %s108 = sphi 0, %s92
    %s112 = sphi 0, %s112
    %s114 = sphi 0, %s112
    %s115 = sphi 0, %s114
    %s129 = sphi 0, %s115
    %s137 = sphi 0, %s139
    %s140 = sphi 0, %s137
    %s141 = sphi 0, %s140
    %s157 = sphi 0, %s141
  $region4: #{cfl_forward.1} parent=0 // loop_header_branch
    %13 = sbr.rel (%p11) target = $region8
  $region5: #{cfl_forward.1} parent=0 // loop_body
    %s15 = ssub.s32 %s10, 1
    %s16 = ssub.s32 %s10, 2
    %s23 = sadd.s32 1, %s18
    %p24 = scmp.ge.s32.totalorder %s23, 1
    %s25 = scalar_select %p24, 0, %s23
    %s26 = sadd.s32 1, %s17
    %s27 = scalar_select %p24, %s26, %s17
    %p28 = scmp.ge.s32.totalorder %s27, 2
    %s29 = scalar_select %p28, 0, %s27
    %s30 = ssub.s32 %s17, %s29
    %p31 = scmp.eq.s32.totalorder %s30, 0
    %s33 = sadd.s32 %s32, 1
    %s34 = scalar_select %p31, %s32, %s33
    %p37 = pneg %p31
    %p38 = scmp.eq.s32.totalorder %s10, 1
    %p39 = por %p37, %p38
    %p40 = scmp.ne.s32.totalorder %s32, %s35
    %p41 = scmp.eq.s32.totalorder %s10, 0
    %p42 = por %p40, %p41
    %p43 = scmp.ne.s32.totalorder %s32, %s35
    %p44 = scmp.eq.s32.totalorder %s15, 1
    %p45 = por %p43, %p44
    %p46 = scmp.ne.s32.totalorder %s35, %s36
    %p47 = scmp.eq.s32.totalorder %s15, 0
    %p48 = por %p46, %p47
    %p49 = scmp.ne.s32.totalorder %s35, %s36
    %p50 = scmp.eq.s32.totalorder %s16, 1
    %p51 = por %p49, %p50
    %p53 = scmp.ne.s32.totalorder %s36, %s52
    %p54 = scmp.eq.s32.totalorder %s16, 0
    %p55 = por %p53, %p54
    %s56 = ssub.s32 %s17, %s29
    %s57 = ssub.s32 %s18, %s25
    %s58 = sor.u32 %s56, %s57
    %p59 = scmp.eq.s32.totalorder %s58, 0
    %s61 = sadd.s32 %s60, 1
    %s62 = scalar_select %p59, %s60, %s61
    %p65 = pneg %p59
    %p66 = scmp.eq.s32.totalorder %s10, 1
    %p67 = por %p65, %p66
    %p68 = scmp.ne.s32.totalorder %s60, %s63
    %p69 = scmp.eq.s32.totalorder %s10, 0
    %p70 = por %p68, %p69
    %p71 = scmp.ne.s32.totalorder %s60, %s63
    %p72 = scmp.eq.s32.totalorder %s15, 1
    %p73 = por %p71, %p72
    %p74 = scmp.ne.s32.totalorder %s63, %s64
    %p75 = scmp.eq.s32.totalorder %s15, 0
    %p76 = por %p74, %p75
    %p77 = scmp.ne.s32.totalorder %s63, %s64
    %p78 = scmp.eq.s32.totalorder %s16, 1
    %p79 = por %p77, %p78
    %p81 = scmp.ne.s32.totalorder %s64, %s80
    %p82 = scmp.eq.s32.totalorder %s16, 0
    %p83 = por %p81, %p82
    %s84 = ssub.s32 %s17, %s29
    %s85 = ssub.s32 %s18, %s25
    %s86 = sor.u32 %s84, %s85
    %p87 = scmp.eq.s32.totalorder %s86, 0
    %s89 = sadd.s32 %s88, 1
    %s90 = scalar_select %p87, %s88, %s89
    %p93 = pneg %p87
    %p94 = scmp.eq.s32.totalorder %s10, 1
    %p95 = por %p93, %p94
    %p96 = scmp.ne.s32.totalorder %s88, %s91
    %p97 = scmp.eq.s32.totalorder %s10, 0
    %p98 = por %p96, %p97
    %p99 = scmp.ne.s32.totalorder %s88, %s91
    %p100 = scmp.eq.s32.totalorder %s15, 1
    %p101 = por %p99, %p100
    %p102 = scmp.ne.s32.totalorder %s91, %s92
    %p103 = scmp.eq.s32.totalorder %s15, 0
    %p104 = por %p102, %p103
    %p105 = scmp.ne.s32.totalorder %s91, %s92
    %p106 = scmp.eq.s32.totalorder %s16, 1
    %p107 = por %p105, %p106
    %p109 = scmp.ne.s32.totalorder %s92, %s108
    %p110 = scmp.eq.s32.totalorder %s16, 0
    %p111 = por %p109, %p110
    %s113 = sadd.s32 %s112, 1
    %p116 = scmp.eq.s32.totalorder %s10, 1
    %p117 = scmp.ne.s32.totalorder %s112, %s114
    %p118 = scmp.eq.s32.totalorder %s10, 0
    %p119 = por %p117, %p118
    %p120 = scmp.ne.s32.totalorder %s112, %s114
    %p121 = scmp.eq.s32.totalorder %s15, 1
    %p122 = por %p120, %p121
    %p123 = scmp.ne.s32.totalorder %s114, %s115
    %p124 = scmp.eq.s32.totalorder %s15, 0
    %p125 = por %p123, %p124
    %p126 = scmp.ne.s32.totalorder %s114, %s115
    %p127 = scmp.eq.s32.totalorder %s16, 1
    %p128 = por %p126, %p127
    %p130 = scmp.ne.s32.totalorder %s115, %s129
    %p131 = scmp.eq.s32.totalorder %s16, 0
    %p132 = por %p130, %p131
    %s133 = ssub.s32 %s17, %s29
    %s134 = ssub.s32 %s18, %s25
    %s135 = sor.u32 %s133, %s134
    %p136 = scmp.eq.s32.totalorder %s135, 0
    %s138 = sadd.s32 %s137, 1
    %s139 = scalar_select %p136, %s137, %s138
    %p142 = pneg %p136
    %p143 = scmp.eq.s32.totalorder %s10, 1
    %p144 = por %p142, %p143
    %p145 = scmp.ne.s32.totalorder %s137, %s140
    %p146 = scmp.eq.s32.totalorder %s10, 0
    %p147 = por %p145, %p146
    %p148 = scmp.ne.s32.totalorder %s137, %s140
    %p149 = scmp.eq.s32.totalorder %s15, 1
    %p150 = por %p148, %p149
    %p151 = scmp.ne.s32.totalorder %s140, %s141
    %p152 = scmp.eq.s32.totalorder %s15, 0
    %p153 = por %p151, %p152
    %p154 = scmp.ne.s32.totalorder %s140, %s141
    %p155 = scmp.eq.s32.totalorder %s16, 1
    %p156 = por %p154, %p155
    %p158 = scmp.ne.s32.totalorder %s141, %s157
    %p159 = scmp.eq.s32.totalorder %s16, 0
    %p160 = por %p158, %p159
    %p161 = scmp.le.s32.totalorder 1, %s10
    %p162 = scmp.lt.s32.totalorder %s10, 3
    %p163 = pnand %p161, %p162
    %p164 = pneg %p163
    // Predicated region
    $region9: #{cfl_forward.1} parent=5 // pred_check
      _
    $region10: #{cfl_forward.1} parent=5 // pred_check_branch
      %166 = sbr.rel (%p163) target = $region12
    $region11: #{cfl_forward.1} parent=5 // pred_region
      %s167 = ssub.s32 %s10, 1
      // Predicated region
      $region13: #{cfl_forward.1} parent=11 // pred_check
        %p168 = pneg %p125
      $region14: #{cfl_forward.1} parent=11 // pred_check_branch
        %170 = sbr.rel (%p168) target = $region16
      $region15: #{cfl_forward.1} parent=11 // pred_region
        _
      $region16: #{cfl_forward.1} parent=11 // pred_fallthru
        _
    $region12: #{cfl_forward.1} parent=5 // pred_fallthru
      _
    %p171 = scmp.lt.s32.totalorder %s10, 2
    // Predicated region
    $region17: #{cfl_forward.1} parent=5 // pred_check
      %p172 = pneg %p171
    $region18: #{cfl_forward.1} parent=5 // pred_check_branch
      %174 = sbr.rel (%p172) target = $region20
    $region19: #{cfl_forward.1} parent=5 // pred_region
      // Predicated region
      $region21: #{cfl_forward.1} parent=19 // pred_check
        %p175 = pneg %p42
      $region22: #{cfl_forward.1} parent=19 // pred_check_branch
        %177 = sbr.rel (%p175) target = $region24
      $region23: #{cfl_forward.1} parent=19 // pred_region
        %p178 = scmp.lt.s32.totalorder %s17, 1
        %s179 = scalar_select %p178, %s17, 1
        %s180 = scalar_lea.vmem %s0, %s179
      $region24: #{cfl_forward.1} parent=19 // pred_fallthru
        _
      // Predicated region
      $region25: #{cfl_forward.1} parent=19 // pred_check
        %p181 = pneg %p70
      $region26: #{cfl_forward.1} parent=19 // pred_check_branch
        %183 = sbr.rel (%p181) target = $region28
      $region27: #{cfl_forward.1} parent=19 // pred_region
        %p184 = scmp.lt.s32.totalorder %s17, 1
        %s185 = scalar_select %p184, %s17, 1
        %p186 = scmp.lt.s32.totalorder %s18, 0
        %s187 = scalar_select %p186, %s18, 0
        %s188 = sadd.s32 %s187, %s185
        %s189 = smul.addr %s188, 4
        %s190 = scalar_lea.vmem %s1, %s189
      $region28: #{cfl_forward.1} parent=19 // pred_fallthru
        _
      // Predicated region
      $region29: #{cfl_forward.1} parent=19 // pred_check
        %p191 = pneg %p98
      $region30: #{cfl_forward.1} parent=19 // pred_check_branch
        %193 = sbr.rel (%p191) target = $region32
      $region31: #{cfl_forward.1} parent=19 // pred_region
        %p194 = scmp.lt.s32.totalorder %s17, 1
        %s195 = scalar_select %p194, %s17, 1
        %p196 = scmp.lt.s32.totalorder %s18, 0
        %s197 = scalar_select %p196, %s18, 0
        %s198 = smul.addr %s197, 2
        %s199 = smul.addr %s195, 2
        %s200 = sadd.s32 %s198, %s199
        %s201 = smul.addr %s200, 4
        %s202 = scalar_lea.vmem %s2, %s201
      $region32: #{cfl_forward.1} parent=19 // pred_fallthru
        _
    $region20: #{cfl_forward.1} parent=5 // pred_fallthru
      _
    %p203 = scmp.le.s32.totalorder 1, %s10
    %p204 = scmp.lt.s32.totalorder %s10, 3
    %p205 = pnand %p203, %p204
    %p206 = pneg %p205
    // Predicated region
    $region33: #{cfl_forward.1} parent=5 // pred_check
      _
    $region34: #{cfl_forward.1} parent=5 // pred_check_branch
      %208 = sbr.rel (%p205) target = $region36
    $region35: #{cfl_forward.1} parent=5 // pred_region
      %s209 = ssub.s32 %s10, 1
      %p210 = scmp.lt.s32.totalorder %s19, 1
      %s211 = scalar_select %p210, %s19, 1
      %s212 = scalar_lea.vmem %s0, %s211
      %p213 = pneg %p48
      %p214 = pneg %p45
      %p215 = scmp.lt.s32.totalorder %s19, 1
      %s216 = scalar_select %p215, %s19, 1
      %p217 = scmp.lt.s32.totalorder %s20, 0
      %s218 = scalar_select %p217, %s20, 0
      %s219 = sadd.s32 %s218, %s216
      %s220 = smul.addr %s219, 4
      %s221 = scalar_lea.vmem %s1, %s220
      %p222 = pneg %p76
      %p223 = pneg %p73
      %p224 = scmp.lt.s32.totalorder %s19, 1
      %s225 = scalar_select %p224, %s19, 1
      %p226 = scmp.lt.s32.totalorder %s20, 0
      %s227 = scalar_select %p226, %s20, 0
      %s228 = smul.addr %s227, 2
      %s229 = smul.addr %s225, 2
      %s230 = sadd.s32 %s228, %s229
      %s231 = smul.addr %s230, 4
      %s232 = scalar_lea.vmem %s2, %s231
      %p233 = pneg %p104
      %p234 = pneg %p101
      %p235 = pneg %p125
      %p236 = pneg %p122
      %p237 = pneg %p153
      %p238 = pneg %p150
      %p239 = scmp.lt.s32.totalorder %s19, 1
      %s240 = scalar_select %p239, %s19, 1
      %p241 = scmp.lt.s32.totalorder %s20, 0
      %s242 = scalar_select %p241, %s20, 0
      %s243 = smul.addr %s242, 2
      %s244 = smul.addr %s240, 2
      %s245 = sadd.s32 %s243, %s244
      %s246 = smul.addr %s245, 4
      %s247 = scalar_lea.vmem %s4, %s246
      %p248 = scmp.lt.s32.totalorder %s19, 1
      %s249 = scalar_select %p248, %s19, 1
      %s250 = scalar_lea.vmem %s0, %s249
      %p251 = scmp.lt.s32.totalorder %s19, 1
      %s252 = scalar_select %p251, %s19, 1
      %p253 = scmp.lt.s32.totalorder %s20, 0
      %s254 = scalar_select %p253, %s20, 0
      %s255 = sadd.s32 %s254, %s252
      %s256 = smul.addr %s255, 4
      %s257 = scalar_lea.vmem %s1, %s256
      %p258 = scmp.lt.s32.totalorder %s19, 1
      %s259 = scalar_select %p258, %s19, 1
      %p260 = scmp.lt.s32.totalorder %s20, 0
      %s261 = scalar_select %p260, %s20, 0
      %s262 = smul.addr %s261, 2
      %s263 = smul.addr %s259, 2
      %s264 = sadd.s32 %s262, %s263
      %s265 = smul.addr %s264, 4
      %s266 = scalar_lea.vmem %s2, %s265
      %p267 = scmp.lt.s32.totalorder %s19, 1
      %s268 = scalar_select %p267, %s19, 1
      %p269 = scmp.lt.s32.totalorder %s20, 0
      %s270 = scalar_select %p269, %s20, 0
      %s271 = smul.addr %s270, 2
      %s272 = smul.addr %s268, 2
      %s273 = sadd.s32 %s271, %s272
      %s274 = smul.addr %s273, 4
      %s275 = scalar_lea.vmem %s4, %s274
      %v276 = vld [vmem:[%s3] sm:$0xff]
      %v277 = vld [vmem:[%s3 + $0x8] sm:$0xff]
      %v278 = vld [vmem:[%s3 + $0x10] sm:$0xff]
      %v279 = vld [vmem:[%s3 + $0x18] sm:$0xff]
      %v280 = vld [vmem:[%s3 + $0x20] sm:$0xff]
      %v281 = vld [vmem:[%s3 + $0x28] sm:$0xff]
      %v282 = vld [vmem:[%s3 + $0x30] sm:$0xff]
      %v283 = vld [vmem:[%s3 + $0x38] sm:$0xff]
      %v284 = vld [vmem:[%s3 + $0x40] sm:$0xff]
      %v285 = vld [vmem:[%s3 + $0x48] sm:$0xff]
      %v286 = vld [vmem:[%s3 + $0x50] sm:$0xff]
      %v287 = vld [vmem:[%s3 + $0x58] sm:$0xff]
      %v288 = vld [vmem:[%s3 + $0x60] sm:$0xff]
      %v289 = vld [vmem:[%s3 + $0x68] sm:$0xff]
      %v290 = vld [vmem:[%s3 + $0x70] sm:$0xff]
      %v291 = vld [vmem:[%s3 + $0x78] sm:$0xff]
      %v292 = vld [vmem:[%s250] sm:$0x1]
      %vm293 = vcmask 523264
      %v295 = vsel %vm293, %v292, 0
      %297 = vmatprep.subr.mxu0 %v277
      %298 = vmatpush1.msra.mxu0 %v276
      %299 = vmatprep.subr.mxu0 %v279
      %300 = vmatpush1.msra.mxu0 %v278
      %301 = vmatprep.subr.mxu0 %v281
      %302 = vmatpush1.msra.mxu0 %v280
      %303 = vmatprep.subr.mxu0 %v283
      %304 = vmatpush1.msra.mxu0 %v282
      %305 = vmatprep.subr.mxu0 %v285
      %306 = vmatpush1.msra.mxu0 %v284
      %307 = vmatprep.subr.mxu0 %v287
      %308 = vmatpush1.msra.mxu0 %v286
      %309 = vmatprep.subr.mxu0 %v289
      %310 = vmatpush1.msra.mxu0 %v288
      %311 = vmatprep.subr.mxu0 %v291
      %312 = vmatpush1.msra.mxu0 %v290
      %313 = vmatprep.subr.mxu0 0.0
      %314 = vmatpush1.msra.mxu0 0.0
      %315 = vmatprep.subr.mxu0 0.0
      %316 = vmatpush1.msra.mxu0 0.0
      %317 = vmatprep.subr.mxu0 0.0
      %318 = vmatpush1.msra.mxu0 0.0
      %319 = vmatprep.subr.mxu0 0.0
      %320 = vmatpush1.msra.mxu0 0.0
      %321 = vmatprep.subr.mxu0 0.0
      %322 = vmatpush1.msra.mxu0 0.0
      %323 = vmatprep.subr.mxu0 0.0
      %324 = vmatpush1.msra.mxu0 0.0
      %325 = vmatprep.subr.mxu0 0.0
      %326 = vmatpush1.msra.mxu0 0.0
      %327 = vmatprep.subr.mxu0 0.0
      %328 = vmatpush1.msra.mxu0 0.0
      %329 = vmatprep.subr.mxu0 0.0
      %330 = vmatpush1.msra.mxu0 0.0
      %331 = vmatprep.subr.mxu0 0.0
      %332 = vmatpush1.msra.mxu0 0.0
      %333 = vmatprep.subr.mxu0 0.0
      %334 = vmatpush1.msra.mxu0 0.0
      %335 = vmatprep.subr.mxu0 0.0
      %336 = vmatpush1.msra.mxu0 0.0
      %337 = vmatprep.subr.mxu0 0.0
      %338 = vmatpush1.msra.mxu0 0.0
      %339 = vmatprep.subr.mxu0 0.0
      %340 = vmatpush1.msra.mxu0 0.0
      %341 = vmatprep.subr.mxu0 0.0
      %342 = vmatpush1.msra.mxu0 0.0
      %343 = vmatprep.subr.mxu0 0.0
      %344 = vmatpush1.msra.mxu0 0.0
      %345 = vmatprep.subr.mxu0 0.0
      %346 = vmatpush1.msra.mxu0 0.0
      %347 = vmatprep.subr.mxu0 0.0
      %348 = vmatpush1.msra.mxu0 0.0
      %349 = vmatprep.subr.mxu0 0.0
      %350 = vmatpush1.msra.mxu0 0.0
      %351 = vmatprep.subr.mxu0 0.0
      %352 = vmatpush1.msra.mxu0 0.0
      %353 = vmatprep.subr.mxu0 0.0
      %354 = vmatpush1.msra.mxu0 0.0
      %355 = vmatprep.subr.mxu0 0.0
      %356 = vmatpush1.msra.mxu0 0.0
      %357 = vmatprep.subr.mxu0 0.0
      %358 = vmatpush1.msra.mxu0 0.0
      %359 = vmatprep.subr.mxu0 0.0
      %360 = vmatpush1.msra.mxu0 0.0
      %361 = vmatprep.mubr.f32.mxu0 0.0
      %362 = vmatmul.mubr.f32.gmra.mrb[0].mxu0 %v295
      %v363 = vpop.f32.mrb[0].mxu0
      %v364 = vadd.f32 0.0, %v363
      %v365 = vpop.f32.mrb[0].mxu0
      %v366 = vadd.f32 0.0, %v365
      %367 = vdwg.mxu0
      %v368 = vld [vmem:[%s257] sm:$0xf]
      %v370 = vsel %vm293, %v368, 0
      %372 = vmatprep.subr.mxu0 %v277
      %373 = vmatpush1.msra.mxu0 %v276
      %374 = vmatprep.subr.mxu0 %v279
      %375 = vmatpush1.msra.mxu0 %v278
      %376 = vmatprep.subr.mxu0 %v281
      %377 = vmatpush1.msra.mxu0 %v280
      %378 = vmatprep.subr.mxu0 %v283
      %379 = vmatpush1.msra.mxu0 %v282
      %380 = vmatprep.subr.mxu0 %v285
      %381 = vmatpush1.msra.mxu0 %v284
      %382 = vmatprep.subr.mxu0 %v287
      %383 = vmatpush1.msra.mxu0 %v286
      %384 = vmatprep.subr.mxu0 %v289
      %385 = vmatpush1.msra.mxu0 %v288
      %386 = vmatprep.subr.mxu0 %v291
      %387 = vmatpush1.msra.mxu0 %v290
      %388 = vmatprep.subr.mxu0 0.0
      %389 = vmatpush1.msra.mxu0 0.0
      %390 = vmatprep.subr.mxu0 0.0
      %391 = vmatpush1.msra.mxu0 0.0
      %392 = vmatprep.subr.mxu0 0.0
      %393 = vmatpush1.msra.mxu0 0.0
      %394 = vmatprep.subr.mxu0 0.0
      %395 = vmatpush1.msra.mxu0 0.0
      %396 = vmatprep.subr.mxu0 0.0
      %397 = vmatpush1.msra.mxu0 0.0
      %398 = vmatprep.subr.mxu0 0.0
      %399 = vmatpush1.msra.mxu0 0.0
      %400 = vmatprep.subr.mxu0 0.0
      %401 = vmatpush1.msra.mxu0 0.0
      %402 = vmatprep.subr.mxu0 0.0
      %403 = vmatpush1.msra.mxu0 0.0
      %404 = vmatprep.subr.mxu0 0.0
      %405 = vmatpush1.msra.mxu0 0.0
      %406 = vmatprep.subr.mxu0 0.0
      %407 = vmatpush1.msra.mxu0 0.0
      %408 = vmatprep.subr.mxu0 0.0
      %409 = vmatpush1.msra.mxu0 0.0
      %410 = vmatprep.subr.mxu0 0.0
      %411 = vmatpush1.msra.mxu0 0.0
      %412 = vmatprep.subr.mxu0 0.0
      %413 = vmatpush1.msra.mxu0 0.0
      %414 = vmatprep.subr.mxu0 0.0
      %415 = vmatpush1.msra.mxu0 0.0
      %416 = vmatprep.subr.mxu0 0.0
      %417 = vmatpush1.msra.mxu0 0.0
      %418 = vmatprep.subr.mxu0 0.0
      %419 = vmatpush1.msra.mxu0 0.0
      %420 = vmatprep.subr.mxu0 0.0
      %421 = vmatpush1.msra.mxu0 0.0
      %422 = vmatprep.subr.mxu0 0.0
      %423 = vmatpush1.msra.mxu0 0.0
      %424 = vmatprep.subr.mxu0 0.0
      %425 = vmatpush1.msra.mxu0 0.0
      %426 = vmatprep.subr.mxu0 0.0
      %427 = vmatpush1.msra.mxu0 0.0
      %428 = vmatprep.subr.mxu0 0.0
      %429 = vmatpush1.msra.mxu0 0.0
      %430 = vmatprep.subr.mxu0 0.0
      %431 = vmatpush1.msra.mxu0 0.0
      %432 = vmatprep.subr.mxu0 0.0
      %433 = vmatpush1.msra.mxu0 0.0
      %434 = vmatprep.subr.mxu0 0.0
      %435 = vmatpush1.msra.mxu0 0.0
      %436 = vmatprep.mubr.f32.mxu0 0.0
      %437 = vmatmul.mubr.f32.gmra.mrb[0].mxu0 %v370
      %v438 = vpop.f32.mrb[0].mxu0
      %v439 = vadd.f32 0.0, %v438
      %v440 = vpop.f32.mrb[0].mxu0
      %v441 = vadd.f32 0.0, %v440
      %442 = vdwg.mxu0
      %v443 = vld [vmem:[%s266] sm:$0xff]
      %v446 = vcombine.low %v439, %v441
      %v448 = vsub.f32 %v443, %v446
      %v449 = vlaneseq
      %v450 = vshrl.u32 %v449, 7
      %v451 = vsub.s32 0, %v450
      %v452 = vrot.slane %v364, %v451
      %v453 = vlaneseq
      %v454 = vshrl.u32 %v453, 7
      %v455 = vsub.s32 0, %v454
      %v456 = vrot.slane %v366, %v455
      %v458 = vcombine.high %v448, %v448
      %v460 = vmul.f32 %v452, %v448
      %v461 = vmul.f32 %v456, %v458
      %v462 = vadd.f32 %v439, %v460
      %v463 = vadd.f32 %v441, %v461
      %v466 = vcombine.low %v462, %v463
      %468 = vst [vmem:[%s275] sm:$0xff] %v466
      %p469 = scmp.lt.s32.totalorder %s19, 1
      %s470 = scalar_select %p469, %s19, 1
      %p471 = scmp.lt.s32.totalorder %s20, 0
      %s472 = scalar_select %p471, %s20, 0
      %s473 = smul.addr %s472, 2
      %s474 = smul.addr %s470, 2
      %s475 = sadd.s32 %s473, %s474
      %s476 = smul.addr %s475, 4
      %s477 = scalar_lea.vmem %s4, %s476
      // Predicated region
      $region37: #{cfl_forward.1} parent=35 // pred_check
        %p478 = pneg %p150
      $region38: #{cfl_forward.1} parent=35 // pred_check_branch
        %480 = sbr.rel (%p478) target = $region40
      $region39: #{cfl_forward.1} parent=35 // pred_region
        _
      $region40: #{cfl_forward.1} parent=35 // pred_fallthru
        _
    $region36: #{cfl_forward.1} parent=5 // pred_fallthru
      _
    %p481 = scmp.le.s32.totalorder 2, %s10
    // Predicated region
    $region41: #{cfl_forward.1} parent=5 // pred_check
      %p482 = pneg %p481
    $region42: #{cfl_forward.1} parent=5 // pred_check_branch
      %484 = sbr.rel (%p482) target = $region44
    $region43: #{cfl_forward.1} parent=5 // pred_region
      %s485 = ssub.s32 %s10, 2
      // Predicated region
      $region45: #{cfl_forward.1} parent=43 // pred_check
        %p486 = pneg %p156
      $region46: #{cfl_forward.1} parent=43 // pred_check_branch
        %488 = sbr.rel (%p486) target = $region48
      $region47: #{cfl_forward.1} parent=43 // pred_region
        %p489 = scmp.lt.s32.totalorder %s21, 1
        %s490 = scalar_select %p489, %s21, 1
        %p491 = scmp.lt.s32.totalorder %s22, 0
        %s492 = scalar_select %p491, %s22, 0
        %s493 = smul.addr %s492, 2
        %s494 = smul.addr %s490, 2
        %s495 = sadd.s32 %s493, %s494
        %s496 = smul.addr %s495, 4
        %s497 = scalar_lea.vmem %s4, %s496
      $region48: #{cfl_forward.1} parent=43 // pred_fallthru
        _
    $region44: #{cfl_forward.1} parent=5 // pred_fallthru
      _
  $region6: #{cfl_forward.1} parent=0 // loop_footer
    %s14 = sadd.s32 1, %s10
  $region7: #{cfl_forward.1} parent=0 // loop_footer_branch
    %9 = sbr.rel target = $region3
  $region8: #{cfl_forward.1} parent=0 // loop_exit
    _

</llo_original>
